<compile_context>
chip_gen: v7x
topology: tpu7x:2x2x1
jax: 0.10.0
libtpu: 0.0.40
codegen_flags: <defaults>
</compile_context>

<pallas_src>
import functools
import math

import jax
import jax.numpy as jnp
from jax.experimental import pallas as pl
from jax.experimental.pallas import tpu as pltpu


# ----------------------------------------------------------------------------
# Kernel 1: fused QKV projection   y = x @ Wqkv + bqkv
# ----------------------------------------------------------------------------
def _qkv_proj_kernel(x_ref, w_ref, b_ref, o_ref):
    # Native-dtype operands straight to the MXU; accumulate in f32.
    y = jnp.dot(x_ref[...], w_ref[...], preferred_element_type=jnp.float32)
    y = y + b_ref[...].astype(jnp.float32)
    o_ref[...] = y.astype(o_ref.dtype)


# ----------------------------------------------------------------------------
# Kernel 2: attention for one (batch, head-group) block.
# q/k/v refs are (1, S, G*D) slices of the fused qkv buffer; output block is
# the matching (1, S, G*D) slice of the (B, S, H) context buffer.
# ----------------------------------------------------------------------------
def _attention_kernel(q_ref, k_ref, v_ref, m_ref, o_ref, *, heads, head_dim,
                      scale):
    D = head_dim
    mask = m_ref[0].astype(jnp.float32)          # (1, S) -> broadcast over rows
    cols = []
    for g in range(heads):                       # static unroll; G is small
        hs = slice(g * D, (g + 1) * D)
        q = q_ref[0, :, hs] * scale              # (S, D), native dtype
        k = k_ref[0, :, hs]                      # (S, D)
        v = v_ref[0, :, hs]                      # (S, D)
        # scores = q @ k^T without materializing the transpose
        s = jax.lax.dot_general(q, k, (((1,), (1,)), ((), ())),
                                preferred_element_type=jnp.float32)
        s = s + mask
        s = s - jnp.max(s, axis=-1, keepdims=True)
        p = jnp.exp(s)                           # unnormalized probs (f32)
        denom = jnp.sum(p, axis=-1, keepdims=True)
        ctx = jnp.dot(p.astype(v.dtype), v, preferred_element_type=jnp.float32)
        cols.append(ctx * pl.reciprocal(denom, approx=True))
    o_ref[0] = jnp.concatenate(cols, axis=-1).astype(o_ref.dtype)


# ----------------------------------------------------------------------------
# Kernel 3: output dense + residual add + TF-style LayerNorm (fused)
# ----------------------------------------------------------------------------
def _dense_residual_layernorm_kernel(ctx_ref, res_ref, w_ref, b_ref,
                                     g_ref, beta_ref, o_ref, *, eps):
    h = jnp.dot(ctx_ref[...], w_ref[...], preferred_element_type=jnp.float32)
    h = h + b_ref[...].astype(jnp.float32)
    h = h + res_ref[...].astype(jnp.float32)     # residual (input_tensor)

    u = jnp.mean(h, axis=-1, keepdims=True)
    xc = h - u
    s = jnp.mean(xc * xc, axis=-1, keepdims=True)
    y = xc * jax.lax.rsqrt(s + eps)
    g = g_ref[...].astype(jnp.float32)
    beta = beta_ref[...].astype(jnp.float32)
    o_ref[...] = (g * y + beta).astype(o_ref.dtype)


# ----------------------------------------------------------------------------
# Wrapper helpers
# ----------------------------------------------------------------------------
def _row_tile(rows, requested):
    # Sublane-aligned row tiles; partial edge blocks are masked by Pallas
    # (compute is row-wise independent), so no full-extent fallback is needed.
    t = min(requested, rows)
    return max(8, ((t + 7) // 8) * 8)


def _heads_per_block(num_heads, head_dim):
    # Smallest head group dividing num_heads whose width (G*D) is a multiple
    # of 128 -> lane-dense qkv reads and ctx stores.
    for g in range(1, num_heads + 1):
        if num_heads % g == 0 and (g * head_dim) % 128 == 0:
            return g
    raise ValueError(
        "need a head group with width multiple of 128; "
        f"num_heads={num_heads}, head_dim={head_dim}")


def multi_head_self_attention(x, attention_mask, params, *, num_heads, eps,
                              tile_rows=256):
    """Forward pass of the PyTorch MultiHeadSelfAttention module (eval mode)."""
    B, S, H = x.shape
    D = H // num_heads
    rows = B * S
    dtype = x.dtype
    x2 = x.reshape(rows, H)

    t = _row_tile(rows, tile_rows)
    row_grid = (pl.cdiv(rows, t),)
    row_cp = pltpu.CompilerParams(
        dimension_semantics=("parallel",),
        vmem_limit_bytes=32 * 1024 * 1024,
    )

    # ---- 1) fused QKV projection -> (B, S, 3H) with layout [Q | K | V] ------
    wqkv = params["wqkv"]                          # (H, 3H)
    bqkv = params["bqkv"].reshape(1, 3 * H)
    qkv = pl.pallas_call(
        _qkv_proj_kernel,
        out_shape=jax.ShapeDtypeStruct((rows, 3 * H), dtype),
        grid_spec=pltpu.PrefetchScalarGridSpec(
            num_scalar_prefetch=0,
            grid=row_grid,
            in_specs=[
                pl.BlockSpec((t, H), lambda i: (i, 0)),
                pl.BlockSpec((H, 3 * H), lambda i: (0, 0)),   # resident weight
                pl.BlockSpec((1, 3 * H), lambda i: (0, 0)),
            ],
            out_specs=pl.BlockSpec((t, 3 * H), lambda i: (i, 0)),
        ),
        compiler_params=row_cp,
    )(x2, wqkv, bqkv).reshape(B, S, 3 * H)         # free reshape, no transpose

    # ---- 2) attention straight off the qkv buffer ---------------------------
    G = _heads_per_block(num_heads, D)             # heads per grid step
    GD = G * D                                     # lane-dense block width
    nhg = num_heads // G                           # head-groups (= blocks in H)
    mask3 = attention_mask.reshape(B, 1, S).astype(dtype)
    scale = 1.0 / math.sqrt(D)
    itemsize = jnp.dtype(dtype).itemsize
    attn_cost = pl.CostEstimate(
        flops=4 * B * num_heads * S * S * D,
        transcendentals=B * num_heads * S * S,
        bytes_accessed=(4 * B * S * H + B * S) * itemsize,
    )
    ctx = pl.pallas_call(
        functools.partial(_attention_kernel, heads=G, head_dim=D, scale=scale),
        out_shape=jax.ShapeDtypeStruct((B, S, H), dtype),
        grid_spec=pltpu.PrefetchScalarGridSpec(
            num_scalar_prefetch=0,
            grid=(B, nhg),
            in_specs=[
                pl.BlockSpec((1, S, GD), lambda b, g: (b, 0, g)),            # Q
                pl.BlockSpec((1, S, GD), lambda b, g: (b, 0, nhg + g)),      # K
                pl.BlockSpec((1, S, GD), lambda b, g: (b, 0, 2 * nhg + g)),  # V
                pl.BlockSpec((1, 1, S), lambda b, g: (b, 0, 0)),             # mask
            ],
            out_specs=pl.BlockSpec((1, S, GD), lambda b, g: (b, 0, g)),
        ),
        compiler_params=pltpu.CompilerParams(
            dimension_semantics=("parallel", "parallel"),
            vmem_limit_bytes=32 * 1024 * 1024,
        ),
        cost_estimate=attn_cost,
    )(qkv, qkv, qkv, mask3)

    # ---- 3) output dense + residual + LayerNorm (fused) ---------------------
    ctx2 = ctx.reshape(rows, H)                    # free reshape, no transpose
    out = pl.pallas_call(
        functools.partial(_dense_residual_layernorm_kernel, eps=eps),
        out_shape=jax.ShapeDtypeStruct((rows, H), dtype),
        grid_spec=pltpu.PrefetchScalarGridSpec(
            num_scalar_prefetch=0,
            grid=row_grid,
            in_specs=[
                pl.BlockSpec((t, H), lambda i: (i, 0)),    # attention context
                pl.BlockSpec((t, H), lambda i: (i, 0)),    # residual (input)
                pl.BlockSpec((H, H), lambda i: (0, 0)),    # Wo (resident)
                pl.BlockSpec((1, H), lambda i: (0, 0)),    # bo
                pl.BlockSpec((1, H), lambda i: (0, 0)),    # LN weight
                pl.BlockSpec((1, H), lambda i: (0, 0)),    # LN bias
            ],
            out_specs=pl.BlockSpec((t, H), lambda i: (i, 0)),
        ),
        compiler_params=row_cp,
    )(ctx2, x2, params["wo"], params["bo"].reshape(1, H),
      params["ln_w"].reshape(1, H), params["ln_b"].reshape(1, H))

    return out.reshape(B, S, H)


# ----------------------------------------------------------------------------
# Test
# ----------------------------------------------------------------------------
if __name__ == "__main__":
    key = jax.random.PRNGKey(0)
    B, S, H, NH = 2, 8, 128, 4
    D = H // NH
    eps = 1e-12

    ks = jax.random.split(key, 10)
    x = jax.random.normal(ks[0], (B, S, H), dtype=jnp.float32)

    def init_w(k, shape):
        return 0.02 * jax.random.normal(k, shape, dtype=jnp.float32)

    wq, wk, wv = init_w(ks[1], (H, H)), init_w(ks[2], (H, H)), init_w(ks[3], (H, H))
    bq, bk, bv = init_w(ks[4], (H,)), init_w(ks[5], (H,)), init_w(ks[6], (H,))
    wo, bo = init_w(ks[7], (H, H)), init_w(ks[8], (H,))
    ln_w = jnp.ones((H,), jnp.float32)
    ln_b = jnp.zeros((H,), jnp.float32)

    # attention mask: (B, 1, 1, S); 0 for valid tokens, large negative for pads
    lens = jnp.array([S, S - 2], dtype=jnp.int32)
    valid = jnp.arange(S)[None, :] < lens[:, None]
    attention_mask = jnp.where(valid, 0.0, -1e4).astype(jnp.float32).reshape(B, 1, 1, S)

    params = {
        "wqkv": jnp.concatenate([wq, wk, wv], axis=1),   # (H, 3H)
        "bqkv": jnp.concatenate([bq, bk, bv], axis=0),   # (3H,)
        "wo": wo, "bo": bo, "ln_w": ln_w, "ln_b": ln_b,
    }

    y = multi_head_self_attention(x, attention_mask, params,
                                  num_heads=NH, eps=eps)
    y = jax.block_until_ready(y)

    # pure-JAX reference (same math as the PyTorch module, eval mode)
    def ref_forward(x, mask):
        q = x @ wq + bq
        k = x @ wk + bk
        v = x @ wv + bv

        def split(tns):
            return tns.reshape(B, S, NH, D).transpose(0, 2, 1, 3)

        qh, kh, vh = split(q), split(k), split(v)
        scores = jnp.einsum("bhqd,bhkd->bhqk", qh, kh) / math.sqrt(D)
        scores = scores + mask
        probs = jax.nn.softmax(scores, axis=-1)
        ctx = jnp.einsum("bhqk,bhkd->bhqd", probs, vh)
        ctx = ctx.transpose(0, 2, 1, 3).reshape(B, S, H)
        h = ctx @ wo + bo + x
        u = h.mean(-1, keepdims=True)
        s = ((h - u) ** 2).mean(-1, keepdims=True)
        return ln_w * ((h - u) / jnp.sqrt(s + eps)) + ln_b

    ref = ref_forward(x, attention_mask)
    max_err = float(jnp.max(jnp.abs(y - ref)))
    assert jnp.allclose(y, ref, atol=1e-2, rtol=1e-2), f"max abs err {max_err}"

    print("KERNEL_OK")
</pallas_src>

<mosaic_0001>
module attributes {stable_mosaic.version = 11 : i64} {
  func.func @_qkv_proj_kernel(%arg0: i32, %arg1: memref<16x128xf32, #tpu.memory_space<vmem>>, %arg2: memref<128x384xf32, #tpu.memory_space<vmem>>, %arg3: memref<1x384xf32, #tpu.memory_space<vmem>>, %arg4: memref<16x384xf32, #tpu.memory_space<vmem>>) attributes {dimension_semantics = [#tpu.dimension_semantics<parallel>], iteration_bounds = array<i64: 1>, scalar_prefetch = 0 : i64, scratch_operands = 0 : i64, tpu.core_type = #tpu.core_type<tc>, window_params = [{transform_indices = @transform_0, window_bounds = array<i64: 16, 128>}, {pipeline_mode = #tpu.pipeline_mode<synchronous>, transform_indices = @transform_1, window_bounds = array<i64: 128, 384>}, {pipeline_mode = #tpu.pipeline_mode<synchronous>, transform_indices = @transform_2, window_bounds = array<i64: 1, 384>}, {transform_indices = @transform_3, window_bounds = array<i64: 16, 384>}]} {
    %c0 = arith.constant 0 : index
    %c0_0 = arith.constant 0 : index
    %0 = vector.load %arg1[%c0, %c0_0] : memref<16x128xf32, #tpu.memory_space<vmem>>, vector<16x128xf32>
    %c0_1 = arith.constant 0 : index
    %c0_2 = arith.constant 0 : index
    %1 = vector.load %arg2[%c0_1, %c0_2] : memref<128x384xf32, #tpu.memory_space<vmem>>, vector<128x384xf32>
    %cst = arith.constant dense<0.000000e+00> : vector<16x384xf32>
    %2 = tpu.matmul %0, %1, %cst {dimension_numbers = #tpu.dot_dimension_numbers<[1], [0], [0], [1], [0, 0, 1, 1], [], []>} : vector<16x128xf32>, vector<128x384xf32>, vector<16x384xf32> -> vector<16x384xf32>
    %c0_3 = arith.constant 0 : index
    %c0_4 = arith.constant 0 : index
    %3 = vector.load %arg3[%c0_3, %c0_4] : memref<1x384xf32, #tpu.memory_space<vmem>>, vector<1x384xf32>
    %4 = vector.broadcast %3 : vector<1x384xf32> to vector<16x384xf32>
    %5 = arith.addf %2, %4 : vector<16x384xf32>
    %c0_5 = arith.constant 0 : index
    %c0_6 = arith.constant 0 : index
    %6 = vector.load %arg4[%c0_5, %c0_6] : memref<16x384xf32, #tpu.memory_space<vmem>>, vector<16x384xf32>
    tpu.vector_store %arg4[%c0_5, %c0_6], %5 {strides = array<i32>} : memref<16x384xf32, #tpu.memory_space<vmem>>, vector<16x384xf32>,
    return
  }
  func.func @transform_0(%arg0: i32) -> (i32, i32) {
    %c0_i32 = arith.constant 0 : i32
    %c0_i32_0 = arith.constant 0 : i32
    return %arg0, %c0_i32 : i32, i32
  }
  func.func @transform_1(%arg0: i32) -> (i32, i32) {
    %c0_i32 = arith.constant 0 : i32
    %c0_i32_0 = arith.constant 0 : i32
    %c0_i32_1 = arith.constant 0 : i32
    return %c0_i32, %c0_i32_0 : i32, i32
  }
  func.func @transform_2(%arg0: i32) -> (i32, i32) {
    %c0_i32 = arith.constant 0 : i32
    %c0_i32_0 = arith.constant 0 : i32
    %c0_i32_1 = arith.constant 0 : i32
    return %c0_i32, %c0_i32_0 : i32, i32
  }
  func.func @transform_3(%arg0: i32) -> (i32, i32) {
    %c0_i32 = arith.constant 0 : i32
    %c0_i32_0 = arith.constant 0 : i32
    return %arg0, %c0_i32 : i32, i32
  }
}

</mosaic_0001>

<llo_original>
// kernel: tpu_custom_call.1
$region0: #{tpu_custom_call.1}
  #allocation0 [shape = 'u32[]', space=smem, size = 0x4, offset = 0x4, fixed_abs, tag = 'smem constant byte address 0x4 - core index']
  #allocation1 [shape = 'u32[144,128]{1,0:T(1,128)}', space=vmem, size = 0x12000, scoped, tag = 'internal scratch']
  %s0 = inlined_call_operand.hbm [shape: f32[16,128], index: 0, kind: input, shape index: {}]
  %s1 = inlined_call_operand.hbm [shape: f32[128,384], index: 1, kind: input, shape index: {}]
  %s2 = inlined_call_operand.vmem [shape: f32[1,384], index: 2, kind: input, shape index: {}]
  %s3 = inlined_call_operand.hbm [shape: f32[16,384], index: 3, kind: output, shape index: {}]
  %s4 = sld [smem:[#allocation0]]
  $region30: #{tpu_custom_call.1} parent=0
    _
  %s6 = ssub.s32 1, %s4
  %s7 = scalar_select 0, %s6, %s4
  $region1: #{tpu_custom_call.1} parent=0
    #allocation2 [shape = 'u8[8192]{0}', space=vmem, size = 0x2000, scoped, tag = 'input window, operand 0, single buffered']
    #allocation3 [shape = 's32[1]{0}', space=sflag, size = 0x4, scoped, tag = 'scoped memory for tpu_custom_call.1']
    #allocation4 [shape = 's32[1]{0}', space=sflag, size = 0x4, scoped, tag = 'scoped memory for tpu_custom_call.1']
    #allocation5 [shape = 'u8[196608]{0}', space=vmem, size = 0x30000, scoped, tag = 'input window, operand 1, single buffered']
    #allocation6 [shape = 's32[1]{0}', space=sflag, size = 0x4, scoped, tag = 'scoped memory for tpu_custom_call.1']
    #allocation7 [shape = 'u8[24576]{0}', space=vmem, size = 0x6000, scoped, tag = 'output window, operand 0, single buffered']
    %8 = vsyncpa [#allocation3], 0
    %9 = vsyncpa [#allocation6], 0
    %10 = vsyncpa [#allocation4], 0
    // Predicated region
    $region2: #{tpu_custom_call.1} parent=1 // pred_check
      _
    $region3: #{tpu_custom_call.1} parent=1 // pred_check_branch
      %12 = sbr.rel (0) target = $region5
    $region4: #{tpu_custom_call.1} parent=1 // pred_region
      %s14 = ssub.s32 256, 256
      %15 = vsyncadd [#allocation3], %s14
      %s16 = sshll.u32 [#allocation2], 4
      %s17 = int_to_ptr.vmem [resolvable:$true] %s16
      %22 = dma.hbm_to_vmem [thread:$0]  %s0, 256, %s17, [#allocation3], 128, 128, 8
    $region5: #{tpu_custom_call.1} parent=1 // pred_fallthru
      _
    // Predicated region
    $region6: #{tpu_custom_call.1} parent=1 // pred_check
      _
    $region7: #{tpu_custom_call.1} parent=1 // pred_check_branch
      %24 = sbr.rel (0) target = $region9
    $region8: #{tpu_custom_call.1} parent=1 // pred_region
      %s26 = ssub.s32 6144, 6144
      %27 = vsyncadd [#allocation6], %s26
      %s28 = sshll.u32 [#allocation5], 4
      %s29 = int_to_ptr.vmem [resolvable:$true] %s28
      %34 = dma.hbm_to_vmem [thread:$0]  %s1, 6144, %s29, [#allocation6], 384, 384, 24
    $region9: #{tpu_custom_call.1} parent=1 // pred_fallthru
      _
    // Predicated region
    $region10: #{tpu_custom_call.1} parent=1 // pred_check
      _
    $region11: #{tpu_custom_call.1} parent=1 // pred_check_branch
      %36 = sbr.rel (0) target = $region13
    $region12: #{tpu_custom_call.1} parent=1 // pred_region
      _
    $region13: #{tpu_custom_call.1} parent=1 // pred_fallthru
      _
    // Predicated region
    $region14: #{tpu_custom_call.1} parent=1 // pred_check
      _
    $region15: #{tpu_custom_call.1} parent=1 // pred_check_branch
      %38 = sbr.rel (0) target = $region17
    $region16: #{tpu_custom_call.1} parent=1 // pred_region
      %39 = dma.done [#allocation3], 256
    $region17: #{tpu_custom_call.1} parent=1 // pred_fallthru
      _
    // Predicated region
    $region18: #{tpu_custom_call.1} parent=1 // pred_check
      _
    $region19: #{tpu_custom_call.1} parent=1 // pred_check_branch
      %41 = sbr.rel (0) target = $region21
    $region20: #{tpu_custom_call.1} parent=1 // pred_region
      %42 = dma.done [#allocation6], 6144
    $region21: #{tpu_custom_call.1} parent=1 // pred_fallthru
      _
    %v43 = vld [vmem:[#allocation2] sm:$0xff]
    %v44 = vld [vmem:[#allocation2 + $0x8] sm:$0xff]
    %v45 = vld [vmem:[#allocation5] sm:$0xff]
    %v46 = vld [vmem:[#allocation5 + $0x8] sm:$0xff]
    %v47 = vld [vmem:[#allocation5 + $0x10] sm:$0xff]
    %v48 = vld [vmem:[#allocation5 + $0x18] sm:$0xff]
    %v49 = vld [vmem:[#allocation5 + $0x20] sm:$0xff]
    %v50 = vld [vmem:[#allocation5 + $0x28] sm:$0xff]
    %v51 = vld [vmem:[#allocation5 + $0x30] sm:$0xff]
    %v52 = vld [vmem:[#allocation5 + $0x38] sm:$0xff]
    %v53 = vld [vmem:[#allocation5 + $0x40] sm:$0xff]
    %v54 = vld [vmem:[#allocation5 + $0x48] sm:$0xff]
    %v55 = vld [vmem:[#allocation5 + $0x50] sm:$0xff]
    %v56 = vld [vmem:[#allocation5 + $0x58] sm:$0xff]
    %v57 = vld [vmem:[#allocation5 + $0x60] sm:$0xff]
    %v58 = vld [vmem:[#allocation5 + $0x68] sm:$0xff]
    %v59 = vld [vmem:[#allocation5 + $0x70] sm:$0xff]
    %v60 = vld [vmem:[#allocation5 + $0x78] sm:$0xff]
    %v61 = vld [vmem:[#allocation5 + $0x80] sm:$0xff]
    %v62 = vld [vmem:[#allocation5 + $0x88] sm:$0xff]
    %v63 = vld [vmem:[#allocation5 + $0x90] sm:$0xff]
    %v64 = vld [vmem:[#allocation5 + $0x98] sm:$0xff]
    %v65 = vld [vmem:[#allocation5 + $0xa0] sm:$0xff]
    %v66 = vld [vmem:[#allocation5 + $0xa8] sm:$0xff]
    %v67 = vld [vmem:[#allocation5 + $0xb0] sm:$0xff]
    %v68 = vld [vmem:[#allocation5 + $0xb8] sm:$0xff]
    %v69 = vld [vmem:[#allocation5 + $0xc0] sm:$0xff]
    %v70 = vld [vmem:[#allocation5 + $0xc8] sm:$0xff]
    %v71 = vld [vmem:[#allocation5 + $0xd0] sm:$0xff]
    %v72 = vld [vmem:[#allocation5 + $0xd8] sm:$0xff]
    %v73 = vld [vmem:[#allocation5 + $0xe0] sm:$0xff]
    %v74 = vld [vmem:[#allocation5 + $0xe8] sm:$0xff]
    %v75 = vld [vmem:[#allocation5 + $0xf0] sm:$0xff]
    %v76 = vld [vmem:[#allocation5 + $0xf8] sm:$0xff]
    %v77 = vld [vmem:[#allocation5 + $0x100] sm:$0xff]
    %v78 = vld [vmem:[#allocation5 + $0x108] sm:$0xff]
    %v79 = vld [vmem:[#allocation5 + $0x110] sm:$0xff]
    %v80 = vld [vmem:[#allocation5 + $0x118] sm:$0xff]
    %v81 = vld [vmem:[#allocation5 + $0x120] sm:$0xff]
    %v82 = vld [vmem:[#allocation5 + $0x128] sm:$0xff]
    %v83 = vld [vmem:[#allocation5 + $0x130] sm:$0xff]
    %v84 = vld [vmem:[#allocation5 + $0x138] sm:$0xff]
    %v85 = vld [vmem:[#allocation5 + $0x140] sm:$0xff]
    %v86 = vld [vmem:[#allocation5 + $0x148] sm:$0xff]
    %v87 = vld [vmem:[#allocation5 + $0x150] sm:$0xff]
    %v88 = vld [vmem:[#allocation5 + $0x158] sm:$0xff]
    %v89 = vld [vmem:[#allocation5 + $0x160] sm:$0xff]
    %v90 = vld [vmem:[#allocation5 + $0x168] sm:$0xff]
    %v91 = vld [vmem:[#allocation5 + $0x170] sm:$0xff]
    %v92 = vld [vmem:[#allocation5 + $0x178] sm:$0xff]
    %v93 = vld [vmem:[%s2] sm:$0x7]
    %v95 = vlaneseq
    %v96 = vshrl.u32 %v95, 7
    %v97 = vsub.s32 0, %v96
    %v98 = vrot.slane %v93, %v97
    %v99 = vlaneseq
    %v100 = vshrl.u32 %v99, 7
    %v101 = vsub.s32 1, %v100
    %v102 = vrot.slane %v93, %v101
    %v103 = vlaneseq
    %v104 = vshrl.u32 %v103, 7
    %v105 = vsub.s32 2, %v104
    %v106 = vrot.slane %v93, %v105
    %110 = vmatprep.subr.mxu0 %v46
    %111 = vmatpush1.msra.mxu0 %v45
    %112 = vmatprep.subr.mxu0 %v49
    %113 = vmatpush1.msra.mxu0 %v48
    %114 = vmatprep.subr.mxu0 %v52
    %115 = vmatpush1.msra.mxu0 %v51
    %116 = vmatprep.subr.mxu0 %v55
    %117 = vmatpush1.msra.mxu0 %v54
    %118 = vmatprep.subr.mxu0 %v58
    %119 = vmatpush1.msra.mxu0 %v57
    %120 = vmatprep.subr.mxu0 %v61
    %121 = vmatpush1.msra.mxu0 %v60
    %122 = vmatprep.subr.mxu0 %v64
    %123 = vmatpush1.msra.mxu0 %v63
    %124 = vmatprep.subr.mxu0 %v67
    %125 = vmatpush1.msra.mxu0 %v66
    %126 = vmatprep.subr.mxu0 %v70
    %127 = vmatpush1.msra.mxu0 %v69
    %128 = vmatprep.subr.mxu0 %v73
    %129 = vmatpush1.msra.mxu0 %v72
    %130 = vmatprep.subr.mxu0 %v76
    %131 = vmatpush1.msra.mxu0 %v75
    %132 = vmatprep.subr.mxu0 %v79
    %133 = vmatpush1.msra.mxu0 %v78
    %134 = vmatprep.subr.mxu0 %v82
    %135 = vmatpush1.msra.mxu0 %v81
    %136 = vmatprep.subr.mxu0 %v85
    %137 = vmatpush1.msra.mxu0 %v84
    %138 = vmatprep.subr.mxu0 %v88
    %139 = vmatpush1.msra.mxu0 %v87
    %140 = vmatprep.subr.mxu0 %v91
    %141 = vmatpush1.msra.mxu0 %v90
    %142 = vmatprep.subr.mxu0 0.0
    %143 = vmatpush1.msra.mxu0 0.0
    %144 = vmatprep.subr.mxu0 0.0
    %145 = vmatpush1.msra.mxu0 0.0
    %146 = vmatprep.subr.mxu0 0.0
    %147 = vmatpush1.msra.mxu0 0.0
    %148 = vmatprep.subr.mxu0 0.0
    %149 = vmatpush1.msra.mxu0 0.0
    %150 = vmatprep.subr.mxu0 0.0
    %151 = vmatpush1.msra.mxu0 0.0
    %152 = vmatprep.subr.mxu0 0.0
    %153 = vmatpush1.msra.mxu0 0.0
    %154 = vmatprep.subr.mxu0 0.0
    %155 = vmatpush1.msra.mxu0 0.0
    %156 = vmatprep.subr.mxu0 0.0
    %157 = vmatpush1.msra.mxu0 0.0
    %158 = vmatprep.subr.mxu0 0.0
    %159 = vmatpush1.msra.mxu0 0.0
    %160 = vmatprep.subr.mxu0 0.0
    %161 = vmatpush1.msra.mxu0 0.0
    %162 = vmatprep.subr.mxu0 0.0
    %163 = vmatpush1.msra.mxu0 0.0
    %164 = vmatprep.subr.mxu0 0.0
    %165 = vmatpush1.msra.mxu0 0.0
    %166 = vmatprep.subr.mxu0 0.0
    %167 = vmatpush1.msra.mxu0 0.0
    %168 = vmatprep.subr.mxu0 0.0
    %169 = vmatpush1.msra.mxu0 0.0
    %170 = vmatprep.subr.mxu0 0.0
    %171 = vmatpush1.msra.mxu0 0.0
    %172 = vmatprep.subr.mxu0 0.0
    %173 = vmatpush1.msra.mxu0 0.0
    %174 = vmatprep.mubr.f32.mxu0 0.0
    %175 = vmatmul.mubr.f32.gmra.mrb[0].mxu0 %v43
    %v176 = vpop.f32.mrb[0].mxu0
    %v177 = vadd.f32 %v98, %v176
    %v178 = vpop.f32.mrb[0].mxu0
    %v179 = vadd.f32 %v102, %v178
    %180 = vmatprep.mubr.f32.mxu0 0.0
    %181 = vmatmul.mubr.f32.gmra.mrb[0].mxu0 %v44
    %v182 = vpop.f32.mrb[0].mxu0
    %v183 = vadd.f32 %v98, %v182
    %v184 = vpop.f32.mrb[0].mxu0
    %v185 = vadd.f32 %v102, %v184
    %186 = vdwg.mxu0
    %187 = vmatprep.subr.mxu0 0.0
    %188 = vmatpush1.msra.mxu0 %v47
    %189 = vmatprep.subr.mxu0 0.0
    %190 = vmatpush1.msra.mxu0 %v50
    %191 = vmatprep.subr.mxu0 0.0
    %192 = vmatpush1.msra.mxu0 %v53
    %193 = vmatprep.subr.mxu0 0.0
    %194 = vmatpush1.msra.mxu0 %v56
    %195 = vmatprep.subr.mxu0 0.0
    %196 = vmatpush1.msra.mxu0 %v59
    %197 = vmatprep.subr.mxu0 0.0
    %198 = vmatpush1.msra.mxu0 %v62
    %199 = vmatprep.subr.mxu0 0.0
    %200 = vmatpush1.msra.mxu0 %v65
    %201 = vmatprep.subr.mxu0 0.0
    %202 = vmatpush1.msra.mxu0 %v68
    %203 = vmatprep.subr.mxu0 0.0
    %204 = vmatpush1.msra.mxu0 %v71
    %205 = vmatprep.subr.mxu0 0.0
    %206 = vmatpush1.msra.mxu0 %v74
    %207 = vmatprep.subr.mxu0 0.0
    %208 = vmatpush1.msra.mxu0 %v77
    %209 = vmatprep.subr.mxu0 0.0
    %210 = vmatpush1.msra.mxu0 %v80
    %211 = vmatprep.subr.mxu0 0.0
    %212 = vmatpush1.msra.mxu0 %v83
    %213 = vmatprep.subr.mxu0 0.0
    %214 = vmatpush1.msra.mxu0 %v86
    %215 = vmatprep.subr.mxu0 0.0
    %216 = vmatpush1.msra.mxu0 %v89
    %217 = vmatprep.subr.mxu0 0.0
    %218 = vmatpush1.msra.mxu0 %v92
    %219 = vmatprep.subr.mxu0 0.0
    %220 = vmatpush1.msra.mxu0 0.0
    %221 = vmatprep.subr.mxu0 0.0
    %222 = vmatpush1.msra.mxu0 0.0
    %223 = vmatprep.subr.mxu0 0.0
    %224 = vmatpush1.msra.mxu0 0.0
    %225 = vmatprep.subr.mxu0 0.0
    %226 = vmatpush1.msra.mxu0 0.0
    %227 = vmatprep.subr.mxu0 0.0
    %228 = vmatpush1.msra.mxu0 0.0
    %229 = vmatprep.subr.mxu0 0.0
    %230 = vmatpush1.msra.mxu0 0.0
    %231 = vmatprep.subr.mxu0 0.0
    %232 = vmatpush1.msra.mxu0 0.0
    %233 = vmatprep.subr.mxu0 0.0
    %234 = vmatpush1.msra.mxu0 0.0
    %235 = vmatprep.subr.mxu0 0.0
    %236 = vmatpush1.msra.mxu0 0.0
    %237 = vmatprep.subr.mxu0 0.0
    %238 = vmatpush1.msra.mxu0 0.0
    %239 = vmatprep.subr.mxu0 0.0
    %240 = vmatpush1.msra.mxu0 0.0
    %241 = vmatprep.subr.mxu0 0.0
    %242 = vmatpush1.msra.mxu0 0.0
    %243 = vmatprep.subr.mxu0 0.0
    %244 = vmatpush1.msra.mxu0 0.0
    %245 = vmatprep.subr.mxu0 0.0
    %246 = vmatpush1.msra.mxu0 0.0
    %247 = vmatprep.subr.mxu0 0.0
    %248 = vmatpush1.msra.mxu0 0.0
    %249 = vmatprep.subr.mxu0 0.0
    %250 = vmatpush1.msra.mxu0 0.0
    %251 = vmatprep.mubr.f32.mxu0 0.0
    %252 = vmatmul.mubr.f32.gmra.mrb[0].mxu0 %v43
    %v253 = vpop.f32.mrb[0].mxu0
    %v254 = vadd.f32 %v106, %v253
    %v255 = vpop.f32.mrb[0].mxu0
    %256 = vmatprep.mubr.f32.mxu0 0.0
    %257 = vmatmul.mubr.f32.gmra.mrb[0].mxu0 %v44
    %v258 = vpop.f32.mrb[0].mxu0
    %v259 = vadd.f32 %v106, %v258
    %v260 = vpop.f32.mrb[0].mxu0
    %261 = vdwg.mxu0
    %262 = vst [vmem:[#allocation7] sm:$0xff] %v177
    %263 = vst [vmem:[#allocation7 + $0x8] sm:$0xff] %v179
    %264 = vst [vmem:[#allocation7 + $0x10] sm:$0xff] %v254
    %265 = vst [vmem:[#allocation7 + $0x18] sm:$0xff] %v183
    %266 = vst [vmem:[#allocation7 + $0x20] sm:$0xff] %v185
    %267 = vst [vmem:[#allocation7 + $0x28] sm:$0xff] %v259
    // Predicated region
    $region22: #{tpu_custom_call.1} parent=1 // pred_check
      _
    $region23: #{tpu_custom_call.1} parent=1 // pred_check_branch
      %269 = sbr.rel (0) target = $region25
    $region24: #{tpu_custom_call.1} parent=1 // pred_region
      %s271 = ssub.s32 768, 768
      %272 = vsyncadd [#allocation4], %s271
      %s273 = sshll.u32 [#allocation7], 4
      %s274 = int_to_ptr.vmem [resolvable:$true] %s273
      %279 = dma.vmem_to_hbm [thread:$0]  %s274, 768, %s3, [#allocation4], 384, 384, 24
    $region25: #{tpu_custom_call.1} parent=1 // pred_fallthru
      _
    // Predicated region
    $region26: #{tpu_custom_call.1} parent=1 // pred_check
      _
    $region27: #{tpu_custom_call.1} parent=1 // pred_check_branch
      %281 = sbr.rel (0) target = $region29
    $region28: #{tpu_custom_call.1} parent=1 // pred_region
      %282 = dma.done [#allocation4], 768
    $region29: #{tpu_custom_call.1} parent=1 // pred_fallthru
      _
    %283 = vsyncpa [#allocation3], 1
    %284 = vsyncpa [#allocation6], 1
    %285 = vsyncpa [#allocation4], 1

</llo_original>
